<compile_context>
chip_gen: v7x
topology: tpu7x:2x2x1
jax: 0.10.0
libtpu: 0.0.40
codegen_flags: <defaults>
</compile_context>

<pallas_src>
import math
import numpy as np
import jax
import jax.numpy as jnp
from jax.experimental import pallas as pl
from jax.experimental.pallas import tpu as pltpu


# ---------------------------------------------------------------------------
# Host-side construction of the (pad + blur + stride) sampling matrices.
# ---------------------------------------------------------------------------
def _binomial_1d(filt_size: int) -> np.ndarray:
    a = np.array([math.comb(filt_size - 1, k) for k in range(filt_size)],
                 dtype=np.float64)
    return a / a.sum()  # filt = (a⊗a)/sum(a⊗a) = (a/Σa) ⊗ (a/Σa)


def _reflect_index(q: int, n: int) -> int:
    # torch.nn.ReflectionPad2d semantics (edge not repeated); valid for pad < n.
    if q < 0:
        q = -q
    if q >= n:
        q = 2 * (n - 1) - q
    return q


def _sampling_matrix(n: int, filt_size: int, stride: int, pad_off: int) -> np.ndarray:
    """Dense (n_out, n) matrix equal to: reflect-pad, 1D blur, stride subsample."""
    pad_l = int(1.0 * (filt_size - 1) / 2) + pad_off
    pad_r = int(np.ceil(1.0 * (filt_size - 1) / 2)) + pad_off
    n_pad = n + pad_l + pad_r
    n_out = (n_pad - filt_size) // stride + 1
    f1d = _binomial_1d(filt_size)
    A = np.zeros((n_out, n), dtype=np.float32)
    for o in range(n_out):
        for t in range(filt_size):
            p = stride * o + t            # coord in padded signal
            q = _reflect_index(p - pad_l, n)
            A[o, q] += f1d[t]
    return A


# ---------------------------------------------------------------------------
# Generation-dependent VMEM budgeting.
# ---------------------------------------------------------------------------
def _vmem_budget():
    """Returns (tile budget bytes for _pick_tb, vmem_limit_bytes for Mosaic)."""
    try:
        cap = int(pltpu.get_tpu_info().vmem_capacity_bytes)
    except Exception:
        cap = 64 * 1024 * 1024                      # conservative (v7x-sized)
    if cap >= 100 * 1024 * 1024:                    # v5e / v6e: 128 MiB physical
        return 48 * 1024 * 1024, 96 * 1024 * 1024
    return 16 * 1024 * 1024, 32 * 1024 * 1024       # v7x: 64 MiB physical


def _pick_tb(B, H, W, Ho, Wo, budget_bytes, e):
    """Plane batch TB per grid step and padded plane count Bp.

    e = bytes per element of the MXU-side data (2 for bf16, 4 for f32)."""
    sub = 8 // math.gcd(H, 8)                       # TB multiple of this => (TB*H)%8==0
    a_bytes = 2 * e * (Ho * H + W * Wo)             # Ah + AwT (double-buffered)
    per_plane = (2 * e * H * W                      # x block (double-buffered)
                 + 2 * 4 * Ho * Wo                  # out block (double-buffered, f32)
                 + e * H * Wo                       # xw scratch
                 + e * Ho * H + 4 * Ho * Wo)        # broadcast-Ah / result temporaries
    cap = max(1, (budget_bytes - a_bytes) // per_plane)
    if B >= 2:
        cap = min(cap, (B + 1) // 2)                # >= 2 grid steps (v7x: 2 TCs)
    cap = max(1, cap)

    # Prefer exact divisors of B (no padding), sublane-aligned, with an even step count.
    divs = [d for d in range(1, min(cap, B) + 1)
            if B % d == 0 and (d % sub == 0 or d == B)]
    if divs:
        even = [d for d in divs if (B // d) % 2 == 0]
        tb = max(even) if even else max(divs)
        return tb, B
    # Otherwise pad B up to a multiple of an aligned TB.
    tb = max(sub, (cap // sub) * sub)
    Bp = -(-B // tb) * tb
    return tb, Bp


# ---------------------------------------------------------------------------
# Pallas kernel: per grid step, TB planes:  out_b = Ah @ (X_b @ Aw^T)
# ---------------------------------------------------------------------------
def _make_kernel(TB, H, Ho, Wo):
    batched = (H % 8 == 0)   # (TB*H, Wo) <-> (TB, H, Wo) value reshape is free

    def kernel(x_ref, ah_ref, awT_ref, o_ref, xw_ref):
        # (1) W-contraction: ONE MXU GEMM over the whole TB-plane slab:
        #     (TB*H, W) @ (W, Wo) -> (TB*H, Wo)
        xw_ref[...] = jnp.dot(x_ref[...], awT_ref[...],
                              preferred_element_type=jnp.float32
                              ).astype(xw_ref.dtype)
        ah = ah_ref[...]                                   # (Ho, H), shared

        if batched:
            # (2) H-contraction for ALL TB planes in one batched dot_general:
            #     out[b,o,w] = sum_h Ah[o,h] * xw[b,h,w]
            xw = xw_ref[...].reshape(TB, H, Wo)
            ah_b = jnp.broadcast_to(ah[None, :, :], (TB, Ho, H))
            y = jax.lax.dot_general(
                ah_b, xw,
                dimension_numbers=(((2,), (1,)), ((0,), (0,))),
                preferred_element_type=jnp.float32)        # (TB, Ho, Wo)
            o_ref[...] = y.astype(o_ref.dtype)
        else:
            # Fallback when H % 8 != 0 (avoids an unaligned in-kernel reshape):
            # per-plane matmuls written into the 3-D output block (its last two
            # dims equal the full array dims, so no sublane constraint).
            def body(i, carry):
                xw_i = xw_ref[pl.ds(i * H, H), :]          # (H, Wo)
                o_ref[i] = jnp.dot(ah, xw_i,
                                   preferred_element_type=jnp.float32
                                   ).astype(o_ref.dtype)
                return carry
            jax.lax.fori_loop(0, TB, body, 0, unroll=min(TB, 8))

    return kernel


def downsample(x: jax.Array, *, filt_size: int = 3, stride: int = 2,
               pad_off: int = 0, use_bf16: bool = False) -> jax.Array:
    """x: (N, C, H, W) float32 -> (N, C, Ho, Wo); matches PyTorch Downsample."""
    N, C, H, W = x.shape

    pad_l = int(1.0 * (filt_size - 1) / 2) + pad_off
    pad_r = int(np.ceil(1.0 * (filt_size - 1) / 2)) + pad_off
    assert pad_l < H and pad_r < H and pad_l < W and pad_r < W, \
        "ReflectionPad2d requires pad < spatial dim"

    Ah_np = _sampling_matrix(H, filt_size, stride, pad_off)   # (Ho, H)
    Aw_np = _sampling_matrix(W, filt_size, stride, pad_off)   # (Wo, W)
    Ho, Wo = Ah_np.shape[0], Aw_np.shape[0]

    cdt = jnp.bfloat16 if use_bf16 else jnp.float32
    e = 2 if use_bf16 else 4
    Ah = jnp.asarray(Ah_np, dtype=cdt)          # binomial taps are exact in bf16
    AwT = jnp.asarray(Aw_np.T, dtype=cdt)       # (W, Wo)

    B = N * C
    budget, vmem_limit = _vmem_budget()
    TB, Bp = _pick_tb(B, H, W, Ho, Wo, budget, e)

    # Flatten planes: rows [b*H, (b+1)*H) of x2 are plane b. Free reshape; pad only
    # when B has no suitable divisor.
    x2 = x.reshape(B * H, W).astype(cdt)
    if Bp != B:
        x2 = jnp.pad(x2, ((0, (Bp - B) * H), (0, 0)))

    flops = 2 * Bp * (H * W * Wo + Ho * H * Wo)
    bytes_accessed = (Bp * H * W * e
                      + Bp * Ho * Wo * jnp.dtype(x.dtype).itemsize
                      + (Ho * H + W * Wo) * e)

    out3 = pl.pallas_call(
        _make_kernel(TB, H, Ho, Wo),
        out_shape=jax.ShapeDtypeStruct((Bp, Ho, Wo), x.dtype),
        grid=(Bp // TB,),
        in_specs=[
            pl.BlockSpec((TB * H, W), lambda b: (b, 0)),   # TB stacked planes
            pl.BlockSpec((Ho, H), lambda b: (0, 0)),       # shared Ah
            pl.BlockSpec((W, Wo), lambda b: (0, 0)),       # shared Aw^T
        ],
        out_specs=pl.BlockSpec((TB, Ho, Wo), lambda b: (b, 0, 0)),
        scratch_shapes=[pltpu.VMEM((TB * H, Wo), cdt)],
        compiler_params=pltpu.CompilerParams(
            dimension_semantics=("parallel",),
            vmem_limit_bytes=vmem_limit),
        cost_estimate=pl.CostEstimate(flops=int(flops), transcendentals=0,
                                      bytes_accessed=int(bytes_accessed)),
    )(x2, Ah, AwT)

    if Bp != B:
        out3 = out3[:B]
    return out3.reshape(N, C, Ho, Wo)


# ---------------------------------------------------------------------------
# Pure-JAX reference (reflect pad + depthwise strided conv) for validation.
# ---------------------------------------------------------------------------
def downsample_ref(x, *, filt_size=3, stride=2, pad_off=0):
    N, C, H, W = x.shape
    pad_l = int(1.0 * (filt_size - 1) / 2) + pad_off
    pad_r = int(np.ceil(1.0 * (filt_size - 1) / 2)) + pad_off
    a = _binomial_1d(filt_size)
    filt2d = jnp.asarray(np.outer(a, a), dtype=x.dtype)       # already normalized
    xp = jnp.pad(x, ((0, 0), (0, 0), (pad_l, pad_r), (pad_l, pad_r)),
                 mode="reflect")
    Hp, Wp = H + pad_l + pad_r, W + pad_l + pad_r
    Ho = (Hp - filt_size) // stride + 1
    Wo = (Wp - filt_size) // stride + 1
    out = jnp.zeros((N, C, Ho, Wo), dtype=x.dtype)
    for i in range(filt_size):
        for j in range(filt_size):
            patch = xp[:, :, i:i + stride * (Ho - 1) + 1:stride,
                             j:j + stride * (Wo - 1) + 1:stride]
            out = out + filt2d[i, j] * patch
    return out


if __name__ == "__main__":
    key = jax.random.PRNGKey(0)
    N, C, H, W = 2, 4, 16, 16
    x = jax.random.normal(key, (N, C, H, W), dtype=jnp.float32)

    y_ref = downsample_ref(x)

    # f32 path (bit-accurate vs reference)
    y = jax.block_until_ready(downsample(x))
    assert y.shape == (N, C, 8, 8), y.shape
    assert jnp.allclose(y, y_ref, atol=1e-5, rtol=1e-5), \
        float(jnp.max(jnp.abs(y - y_ref)))

    # bf16 MXU path (taps exact in bf16; inputs rounded -> looser tolerance)
    y16 = jax.block_until_ready(downsample(x, use_bf16=True))
    assert jnp.allclose(y16, y_ref, atol=3e-2, rtol=3e-2), \
        float(jnp.max(jnp.abs(y16 - y_ref)))

    print("KERNEL_OK")
</pallas_src>

<mosaic_0001>
module attributes {stable_mosaic.version = 11 : i64} {
  func.func @kernel(%arg0: i32, %arg1: memref<64x16xf32, #tpu.memory_space<vmem>>, %arg2: memref<8x16xf32, #tpu.memory_space<vmem>>, %arg3: memref<16x8xf32, #tpu.memory_space<vmem>>, %arg4: memref<4x8x8xf32, #tpu.memory_space<vmem>>, %arg5: memref<64x8xf32, #tpu.memory_space<vmem>>) attributes {dimension_semantics = [#tpu.dimension_semantics<parallel>], iteration_bounds = array<i64: 2>, scalar_prefetch = 0 : i64, scratch_operands = 1 : i64, tpu.core_type = #tpu.core_type<tc>, window_params = [{transform_indices = @transform_0, window_bounds = array<i64: 64, 16>}, {pipeline_mode = #tpu.pipeline_mode<synchronous>, transform_indices = @transform_1, window_bounds = array<i64: 8, 16>}, {pipeline_mode = #tpu.pipeline_mode<synchronous>, transform_indices = @transform_2, window_bounds = array<i64: 16, 8>}, {transform_indices = @transform_3, window_bounds = array<i64: 4, 8, 8>}]} {
    %c0 = arith.constant 0 : index
    %c0_0 = arith.constant 0 : index
    %0 = vector.load %arg1[%c0, %c0_0] : memref<64x16xf32, #tpu.memory_space<vmem>>, vector<64x16xf32>
    %c0_1 = arith.constant 0 : index
    %c0_2 = arith.constant 0 : index
    %1 = vector.load %arg3[%c0_1, %c0_2] : memref<16x8xf32, #tpu.memory_space<vmem>>, vector<16x8xf32>
    %cst = arith.constant dense<0.000000e+00> : vector<64x8xf32>
    %2 = tpu.matmul %0, %1, %cst {dimension_numbers = #tpu.dot_dimension_numbers<[1], [0], [0], [1], [0, 0, 1, 1], [], []>} : vector<64x16xf32>, vector<16x8xf32>, vector<64x8xf32> -> vector<64x8xf32>
    %c0_3 = arith.constant 0 : index
    %c0_4 = arith.constant 0 : index
    %3 = vector.load %arg5[%c0_3, %c0_4] : memref<64x8xf32, #tpu.memory_space<vmem>>, vector<64x8xf32>
    tpu.vector_store %arg5[%c0_3, %c0_4], %2 {strides = array<i32>} : memref<64x8xf32, #tpu.memory_space<vmem>>, vector<64x8xf32>,
    %c0_5 = arith.constant 0 : index
    %c0_6 = arith.constant 0 : index
    %4 = vector.load %arg2[%c0_5, %c0_6] : memref<8x16xf32, #tpu.memory_space<vmem>>, vector<8x16xf32>
    %c0_7 = arith.constant 0 : index
    %c0_8 = arith.constant 0 : index
    %5 = vector.load %arg5[%c0_7, %c0_8] : memref<64x8xf32, #tpu.memory_space<vmem>>, vector<64x8xf32>
    %6 = vector.shape_cast %5 : vector<64x8xf32> to vector<4x16x8xf32>
    %7 = vector.shape_cast %4 : vector<8x16xf32> to vector<1x8x16xf32>
    %8 = vector.shape_cast %7 : vector<1x8x16xf32> to vector<1x8x16xf32>
    %9 = vector.broadcast %8 : vector<1x8x16xf32> to vector<4x8x16xf32>
    %cst_9 = arith.constant dense<0.000000e+00> : vector<4x8x8xf32>
    %10 = tpu.matmul %9, %6, %cst_9 {dimension_numbers = #tpu.dot_dimension_numbers<[2], [1], [1], [2], [0, 0, 0, 1, 1, 2], [0], [0]>} : vector<4x8x16xf32>, vector<4x16x8xf32>, vector<4x8x8xf32> -> vector<4x8x8xf32>
    %c0_10 = arith.constant 0 : index
    %c0_11 = arith.constant 0 : index
    %c0_12 = arith.constant 0 : index
    %11 = vector.load %arg4[%c0_10, %c0_11, %c0_12] : memref<4x8x8xf32, #tpu.memory_space<vmem>>, vector<4x8x8xf32>
    tpu.vector_store %arg4[%c0_10, %c0_11, %c0_12], %10 {strides = array<i32>} : memref<4x8x8xf32, #tpu.memory_space<vmem>>, vector<4x8x8xf32>,
    return
  }
  func.func @transform_0(%arg0: i32) -> (i32, i32) {
    %c0_i32 = arith.constant 0 : i32
    %c0_i32_0 = arith.constant 0 : i32
    return %arg0, %c0_i32 : i32, i32
  }
  func.func @transform_1(%arg0: i32) -> (i32, i32) {
    %c0_i32 = arith.constant 0 : i32
    %c0_i32_0 = arith.constant 0 : i32
    %c0_i32_1 = arith.constant 0 : i32
    return %c0_i32, %c0_i32_0 : i32, i32
  }
  func.func @transform_2(%arg0: i32) -> (i32, i32) {
    %c0_i32 = arith.constant 0 : i32
    %c0_i32_0 = arith.constant 0 : i32
    %c0_i32_1 = arith.constant 0 : i32
    return %c0_i32, %c0_i32_0 : i32, i32
  }
  func.func @transform_3(%arg0: i32) -> (i32, i32, i32) {
    %c0_i32 = arith.constant 0 : i32
    %c0_i32_0 = arith.constant 0 : i32
    %c0_i32_1 = arith.constant 0 : i32
    return %arg0, %c0_i32, %c0_i32_0 : i32, i32, i32
  }
}

</mosaic_0001>

<llo_original>
// kernel: tpu_custom_call.1
$region0: #{tpu_custom_call.1}
  #allocation0 [shape = 'u32[]', space=smem, size = 0x4, offset = 0x4, fixed_abs, tag = 'smem constant byte address 0x4 - core index']
  #allocation1 [shape = 'u32[144,128]{1,0:T(1,128)}', space=vmem, size = 0x12000, scoped, tag = 'internal scratch']
  #allocation2 [shape = 'f32[64,8]{1,0:T(8,128)}', space=vmem, size = 0x8000, scoped, tag = 'scratch operand']
  %s0 = inlined_call_operand.vmem [shape: f32[128,16], index: 0, kind: input, shape index: {}]
  %s1 = inlined_call_operand.vmem [shape: f32[8,16], index: 1, kind: input, shape index: {}]
  %s2 = inlined_call_operand.vmem [shape: f32[16,8], index: 2, kind: input, shape index: {}]
  %s3 = inlined_call_operand.hbm [shape: f32[8,8,8], index: 3, kind: output, shape index: {}]
  %s4 = sld [smem:[#allocation0]]
  $region45: #{tpu_custom_call.1} parent=0
    _
  %s6 = ssub.s32 1, %s4
  %s7 = scalar_select 0, %s6, %s4
  $region1: #{tpu_custom_call.1} parent=0
    #allocation3 [shape = 'u8[32768]{0}', space=vmem, size = 0x8000, scoped, tag = 'output window, operand 0']
    #allocation4 [shape = 's32[2]{0}', space=sflag, size = 0x8, scoped, tag = 'scoped memory for tpu_custom_call.1']
    %8 = vsyncpa [#allocation4], 0
    %s9 = scalar_lea.sflag [#allocation4], 1
    %10 = vsyncpa %s9, 0
    loop: start=0, step=1, limit=4
    $region2: #{tpu_custom_call.1} parent=1 // loop_pre_header
      _
    $region3: #{tpu_custom_call.1} parent=1 // loop_header
      %s12 = sphi 0, %s16
      %p13 = scmp.ge.s32.totalorder %s12, 4
      %s22 = sphi 0, %s24
      %s25 = sphi 0, %s22
      %s26 = sphi 0, %s25
      %s42 = sphi 0, %s26
      %s46 = sphi 0, %s46
      %s48 = sphi 0, %s46
      %s49 = sphi 0, %s48
      %s63 = sphi 0, %s49
      %s67 = sphi 0, %s67
      %s69 = sphi 0, %s67
      %s70 = sphi 0, %s69
      %s84 = sphi 0, %s70
      %s90 = sphi 0, %s92
      %s93 = sphi 0, %s90
      %s94 = sphi 0, %s93
      %s110 = sphi 0, %s94
    $region4: #{tpu_custom_call.1} parent=1 // loop_header_branch
      %15 = sbr.rel (%p13) target = $region8
    $region5: #{tpu_custom_call.1} parent=1 // loop_body
      %s17 = ssub.s32 %s12, 1
      %s18 = ssub.s32 %s12, 2
      %s19 = sadd.s32 %s12, 1
      %s20 = ssub.s32 %s12, %s19
      %p21 = scmp.eq.s32.totalorder %s20, 0
      %s23 = sadd.s32 %s22, 1
      %s24 = scalar_select %p21, %s22, %s23
      %p27 = pneg %p21
      %p28 = scmp.eq.s32.totalorder %s12, 1
      %p29 = por %p27, %p28
      %p30 = scmp.ne.s32.totalorder %s22, %s25
      %p31 = scmp.eq.s32.totalorder %s12, 0
      %p32 = por %p30, %p31
      %p33 = scmp.ne.s32.totalorder %s22, %s25
      %p34 = scmp.eq.s32.totalorder %s17, 1
      %p35 = por %p33, %p34
      %p36 = scmp.ne.s32.totalorder %s25, %s26
      %p37 = scmp.eq.s32.totalorder %s17, 0
      %p38 = por %p36, %p37
      %p39 = scmp.ne.s32.totalorder %s25, %s26
      %p40 = scmp.eq.s32.totalorder %s18, 1
      %p41 = por %p39, %p40
      %p43 = scmp.ne.s32.totalorder %s26, %s42
      %p44 = scmp.eq.s32.totalorder %s18, 0
      %p45 = por %p43, %p44
      %s47 = sadd.s32 %s46, 1
      %p50 = scmp.eq.s32.totalorder %s12, 1
      %p51 = scmp.ne.s32.totalorder %s46, %s48
      %p52 = scmp.eq.s32.totalorder %s12, 0
      %p53 = por %p51, %p52
      %p54 = scmp.ne.s32.totalorder %s46, %s48
      %p55 = scmp.eq.s32.totalorder %s17, 1
      %p56 = por %p54, %p55
      %p57 = scmp.ne.s32.totalorder %s48, %s49
      %p58 = scmp.eq.s32.totalorder %s17, 0
      %p59 = por %p57, %p58
      %p60 = scmp.ne.s32.totalorder %s48, %s49
      %p61 = scmp.eq.s32.totalorder %s18, 1
      %p62 = por %p60, %p61
      %p64 = scmp.ne.s32.totalorder %s49, %s63
      %p65 = scmp.eq.s32.totalorder %s18, 0
      %p66 = por %p64, %p65
      %s68 = sadd.s32 %s67, 1
      %p71 = scmp.eq.s32.totalorder %s12, 1
      %p72 = scmp.ne.s32.totalorder %s67, %s69
      %p73 = scmp.eq.s32.totalorder %s12, 0
      %p74 = por %p72, %p73
      %p75 = scmp.ne.s32.totalorder %s67, %s69
      %p76 = scmp.eq.s32.totalorder %s17, 1
      %p77 = por %p75, %p76
      %p78 = scmp.ne.s32.totalorder %s69, %s70
      %p79 = scmp.eq.s32.totalorder %s17, 0
      %p80 = por %p78, %p79
      %p81 = scmp.ne.s32.totalorder %s69, %s70
      %p82 = scmp.eq.s32.totalorder %s18, 1
      %p83 = por %p81, %p82
      %p85 = scmp.ne.s32.totalorder %s70, %s84
      %p86 = scmp.eq.s32.totalorder %s18, 0
      %p87 = por %p85, %p86
      %s88 = ssub.s32 %s12, %s19
      %p89 = scmp.eq.s32.totalorder %s88, 0
      %s91 = sadd.s32 %s90, 1
      %s92 = scalar_select %p89, %s90, %s91
      %p95 = pneg %p89
      %p96 = scmp.eq.s32.totalorder %s12, 1
      %p97 = por %p95, %p96
      %p98 = scmp.ne.s32.totalorder %s90, %s93
      %p99 = scmp.eq.s32.totalorder %s12, 0
      %p100 = por %p98, %p99
      %p101 = scmp.ne.s32.totalorder %s90, %s93
      %p102 = scmp.eq.s32.totalorder %s17, 1
      %p103 = por %p101, %p102
      %p104 = scmp.ne.s32.totalorder %s93, %s94
      %p105 = scmp.eq.s32.totalorder %s17, 0
      %p106 = por %p104, %p105
      %p107 = scmp.ne.s32.totalorder %s93, %s94
      %p108 = scmp.eq.s32.totalorder %s18, 1
      %p109 = por %p107, %p108
      %p111 = scmp.ne.s32.totalorder %s94, %s110
      %p112 = scmp.eq.s32.totalorder %s18, 0
      %p113 = por %p111, %p112
      %p114 = scmp.le.s32.totalorder 1, %s12
      %p115 = scmp.lt.s32.totalorder %s12, 3
      %p116 = pnand %p114, %p115
      %p117 = pneg %p116
      // Predicated region
      $region9: #{tpu_custom_call.1} parent=5 // pred_check
        _
      $region10: #{tpu_custom_call.1} parent=5 // pred_check_branch
        %119 = sbr.rel (%p116) target = $region12
      $region11: #{tpu_custom_call.1} parent=5 // pred_region
        %s120 = ssub.s32 %s12, 1
        // Predicated region
        $region13: #{tpu_custom_call.1} parent=11 // pred_check
          %p121 = pneg %p59
        $region14: #{tpu_custom_call.1} parent=11 // pred_check_branch
          %123 = sbr.rel (%p121) target = $region16
        $region15: #{tpu_custom_call.1} parent=11 // pred_region
          _
        $region16: #{tpu_custom_call.1} parent=11 // pred_fallthru
          _
        // Predicated region
        $region17: #{tpu_custom_call.1} parent=11 // pred_check
          %p124 = pneg %p80
        $region18: #{tpu_custom_call.1} parent=11 // pred_check_branch
          %126 = sbr.rel (%p124) target = $region20
        $region19: #{tpu_custom_call.1} parent=11 // pred_region
          _
        $region20: #{tpu_custom_call.1} parent=11 // pred_fallthru
          _
      $region12: #{tpu_custom_call.1} parent=5 // pred_fallthru
        _
      %p127 = scmp.lt.s32.totalorder %s12, 2
      // Predicated region
      $region21: #{tpu_custom_call.1} parent=5 // pred_check
        %p128 = pneg %p127
      $region22: #{tpu_custom_call.1} parent=5 // pred_check_branch
        %130 = sbr.rel (%p128) target = $region24
      $region23: #{tpu_custom_call.1} parent=5 // pred_region
        // Predicated region
        $region25: #{tpu_custom_call.1} parent=23 // pred_check
          %p131 = pneg %p32
        $region26: #{tpu_custom_call.1} parent=23 // pred_check_branch
          %133 = sbr.rel (%p131) target = $region28
        $region27: #{tpu_custom_call.1} parent=23 // pred_region
          %s134 = smul.u32 8, %s12
          %p135 = scmp.lt.s32.totalorder %s134, 15
          %s136 = scalar_select %p135, %s134, 15
          %s137 = smul.addr %s136, 8
          %s138 = scalar_lea.vmem %s0, %s137
          %s139 = smul.u32 8, %s12
        $region28: #{tpu_custom_call.1} parent=23 // pred_fallthru
          _
      $region24: #{tpu_custom_call.1} parent=5 // pred_fallthru
        _
      %p140 = scmp.le.s32.totalorder 1, %s12
      %p141 = scmp.lt.s32.totalorder %s12, 3
      %p142 = pnand %p140, %p141
      %p143 = pneg %p142
      // Predicated region
      $region29: #{tpu_custom_call.1} parent=5 // pred_check
        _
      $region30: #{tpu_custom_call.1} parent=5 // pred_check_branch
        %145 = sbr.rel (%p142) target = $region32
      $region31: #{tpu_custom_call.1} parent=5 // pred_region
        %s146 = ssub.s32 %s12, 1
        %s147 = smul.u32 8, %s17
        %p148 = scmp.lt.s32.totalorder %s147, 15
        %s149 = scalar_select %p148, %s147, 15
        %s150 = smul.addr %s149, 8
        %s151 = scalar_lea.vmem %s0, %s150
        %p152 = pneg %p38
        %p153 = pneg %p35
        %p154 = pneg %p59
        %p155 = pneg %p56
        %p156 = pneg %p80
        %p157 = pneg %p77
        %p158 = pneg %p106
        %p159 = pneg %p103
        %s160 = sand.u32 %s93, 1
        %s161 = scalar_lea.sflag [#allocation4], %s160
        %s162 = sand.u32 %s93, 1
        %s163 = smul.addr %s162, 32
        %s164 = scalar_lea.vmem [#allocation3], %s163
        %s165 = smul.u32 8, %s17
        %p166 = scmp.lt.s32.totalorder %s165, 15
        %s167 = scalar_select %p166, %s165, 15
        %s168 = smul.addr %s167, 8
        %s169 = scalar_lea.vmem %s0, %s168
        %s170 = smul.u32 8, %s17
        %s171 = smul.u32 4, %s17
        %v172 = vld [vmem:[%s169] sm:$0xff]
        %v173 = vld [vmem:[%s169 + $0x8] sm:$0xff]
        %v174 = vld [vmem:[%s169 + $0x10] sm:$0xff]
        %v175 = vld [vmem:[%s169 + $0x18] sm:$0xff]
        %v176 = vld [vmem:[%s169 + $0x20] sm:$0xff]
        %v177 = vld [vmem:[%s169 + $0x28] sm:$0xff]
        %v178 = vld [vmem:[%s169 + $0x30] sm:$0xff]
        %v179 = vld [vmem:[%s169 + $0x38] sm:$0xff]
        %v180 = vld [vmem:[%s2] sm:$0xff]
        %v181 = vld [vmem:[%s2 + $0x8] sm:$0xff]
        %vm182 = vcmask 130048
        %v184 = vsel %vm182, %v172, 0
        %v187 = vsel %vm182, %v173, 0
        %v190 = vsel %vm182, %v174, 0
        %v193 = vsel %vm182, %v175, 0
        %v196 = vsel %vm182, %v176, 0
        %v199 = vsel %vm182, %v177, 0
        %v202 = vsel %vm182, %v178, 0
        %v205 = vsel %vm182, %v179, 0
        %207 = vmatprep.subr.mxu0 0.0
        %208 = vmatpush1.msra.mxu0 %v180
        %209 = vmatprep.subr.mxu0 0.0
        %210 = vmatpush1.msra.mxu0 %v181
        %211 = vmatprep.subr.mxu0 0.0
        %212 = vmatpush1.msra.mxu0 0.0
        %213 = vmatprep.subr.mxu0 0.0
        %214 = vmatpush1.msra.mxu0 0.0
        %215 = vmatprep.subr.mxu0 0.0
        %216 = vmatpush1.msra.mxu0 0.0
        %217 = vmatprep.subr.mxu0 0.0
        %218 = vmatpush1.msra.mxu0 0.0
        %219 = vmatprep.subr.mxu0 0.0
        %220 = vmatpush1.msra.mxu0 0.0
        %221 = vmatprep.subr.mxu0 0.0
        %222 = vmatpush1.msra.mxu0 0.0
        %223 = vmatprep.subr.mxu0 0.0
        %224 = vmatpush1.msra.mxu0 0.0
        %225 = vmatprep.subr.mxu0 0.0
        %226 = vmatpush1.msra.mxu0 0.0
        %227 = vmatprep.subr.mxu0 0.0
        %228 = vmatpush1.msra.mxu0 0.0
        %229 = vmatprep.subr.mxu0 0.0
        %230 = vmatpush1.msra.mxu0 0.0
        %231 = vmatprep.subr.mxu0 0.0
        %232 = vmatpush1.msra.mxu0 0.0
        %233 = vmatprep.subr.mxu0 0.0
        %234 = vmatpush1.msra.mxu0 0.0
        %235 = vmatprep.subr.mxu0 0.0
        %236 = vmatpush1.msra.mxu0 0.0
        %237 = vmatprep.subr.mxu0 0.0
        %238 = vmatpush1.msra.mxu0 0.0
        %239 = vmatprep.subr.mxu0 0.0
        %240 = vmatpush1.msra.mxu0 0.0
        %241 = vmatprep.subr.mxu0 0.0
        %242 = vmatpush1.msra.mxu0 0.0
        %243 = vmatprep.subr.mxu0 0.0
        %244 = vmatpush1.msra.mxu0 0.0
        %245 = vmatprep.subr.mxu0 0.0
        %246 = vmatpush1.msra.mxu0 0.0
        %247 = vmatprep.subr.mxu0 0.0
        %248 = vmatpush1.msra.mxu0 0.0
        %249 = vmatprep.subr.mxu0 0.0
        %250 = vmatpush1.msra.mxu0 0.0
        %251 = vmatprep.subr.mxu0 0.0
        %252 = vmatpush1.msra.mxu0 0.0
        %253 = vmatprep.subr.mxu0 0.0
        %254 = vmatpush1.msra.mxu0 0.0
        %255 = vmatprep.subr.mxu0 0.0
        %256 = vmatpush1.msra.mxu0 0.0
        %257 = vmatprep.subr.mxu0 0.0
        %258 = vmatpush1.msra.mxu0 0.0
        %259 = vmatprep.subr.mxu0 0.0
        %260 = vmatpush1.msra.mxu0 0.0
        %261 = vmatprep.subr.mxu0 0.0
        %262 = vmatpush1.msra.mxu0 0.0
        %263 = vmatprep.subr.mxu0 0.0
        %264 = vmatpush1.msra.mxu0 0.0
        %265 = vmatprep.subr.mxu0 0.0
        %266 = vmatpush1.msra.mxu0 0.0
        %267 = vmatprep.subr.mxu0 0.0
        %268 = vmatpush1.msra.mxu0 0.0
        %269 = vmatprep.subr.mxu0 0.0
        %270 = vmatpush1.msra.mxu0 0.0
        %271 = vmatprep.mubr.f32.mxu0 0.0
        %272 = vmatmul.mubr.f32.gmra.mrb[0].mxu0 %v184
        %v273 = vpop.f32.mrb[0].mxu0
        %v274 = vadd.f32 0.0, %v273
        %v275 = vpop.f32.mrb[0].mxu0
        %276 = vmatprep.mubr.f32.mxu0 0.0
        %277 = vmatmul.mubr.f32.gmra.mrb[0].mxu0 %v187
        %v278 = vpop.f32.mrb[0].mxu0
        %v279 = vadd.f32 0.0, %v278
        %v280 = vpop.f32.mrb[0].mxu0
        %281 = vmatprep.mubr.f32.mxu0 0.0
        %282 = vmatmul.mubr.f32.gmra.mrb[0].mxu0 %v190
        %v283 = vpop.f32.mrb[0].mxu0
        %v284 = vadd.f32 0.0, %v283
        %v285 = vpop.f32.mrb[0].mxu0
        %286 = vmatprep.mubr.f32.mxu0 0.0
        %287 = vmatmul.mubr.f32.gmra.mrb[0].mxu0 %v193
        %v288 = vpop.f32.mrb[0].mxu0
        %v289 = vadd.f32 0.0, %v288
        %v290 = vpop.f32.mrb[0].mxu0
        %291 = vmatprep.mubr.f32.mxu0 0.0
        %292 = vmatmul.mubr.f32.gmra.mrb[0].mxu0 %v196
        %v293 = vpop.f32.mrb[0].mxu0
        %v294 = vadd.f32 0.0, %v293
        %v295 = vpop.f32.mrb[0].mxu0
        %296 = vmatprep.mubr.f32.mxu0 0.0
        %297 = vmatmul.mubr.f32.gmra.mrb[0].mxu0 %v199
        %v298 = vpop.f32.mrb[0].mxu0
        %v299 = vadd.f32 0.0, %v298
        %v300 = vpop.f32.mrb[0].mxu0
        %301 = vmatprep.mubr.f32.mxu0 0.0
        %302 = vmatmul.mubr.f32.gmra.mrb[0].mxu0 %v202
        %v303 = vpop.f32.mrb[0].mxu0
        %v304 = vadd.f32 0.0, %v303
        %v305 = vpop.f32.mrb[0].mxu0
        %306 = vmatprep.mubr.f32.mxu0 0.0
        %307 = vmatmul.mubr.f32.gmra.mrb[0].mxu0 %v205
        %v308 = vpop.f32.mrb[0].mxu0
        %v309 = vadd.f32 0.0, %v308
        %v310 = vpop.f32.mrb[0].mxu0
        %311 = vdwg.mxu0
        %vm312 = vcmask 64512
        %313 = vst.msk [vmem:[#allocation2] sm:$0xff] %vm312, %v274
        %314 = vst.msk [vmem:[#allocation2 + $0x8] sm:$0xff] %vm312, %v279
        %315 = vst.msk [vmem:[#allocation2 + $0x10] sm:$0xff] %vm312, %v284
        %316 = vst.msk [vmem:[#allocation2 + $0x18] sm:$0xff] %vm312, %v289
        %317 = vst.msk [vmem:[#allocation2 + $0x20] sm:$0xff] %vm312, %v294
        %318 = vst.msk [vmem:[#allocation2 + $0x28] sm:$0xff] %vm312, %v299
        %319 = vst.msk [vmem:[#allocation2 + $0x30] sm:$0xff] %vm312, %v304
        %320 = vst.msk [vmem:[#allocation2 + $0x38] sm:$0xff] %vm312, %v309
        %v321 = vld [vmem:[%s1] sm:$0xff]
        %v322 = vld [vmem:[#allocation2] sm:$0xff]
        %v323 = vld [vmem:[#allocation2 + $0x8] sm:$0xff]
        %v324 = vld [vmem:[#allocation2 + $0x10] sm:$0xff]
        %v325 = vld [vmem:[#allocation2 + $0x18] sm:$0xff]
        %v326 = vld [vmem:[#allocation2 + $0x20] sm:$0xff]
        %v327 = vld [vmem:[#allocation2 + $0x28] sm:$0xff]
        %v328 = vld [vmem:[#allocation2 + $0x30] sm:$0xff]
        %v329 = vld [vmem:[#allocation2 + $0x38] sm:$0xff]
        %v331 = vsel %vm182, %v321, 0
        %333 = vmatprep.subr.mxu0 0.0
        %334 = vmatpush1.msra.mxu0 %v322
        %335 = vmatprep.subr.mxu0 0.0
        %336 = vmatpush1.msra.mxu0 %v323
        %337 = vmatprep.subr.mxu0 0.0
        %338 = vmatpush1.msra.mxu0 0.0
        %339 = vmatprep.subr.mxu0 0.0
        %340 = vmatpush1.msra.mxu0 0.0
        %341 = vmatprep.subr.mxu0 0.0
        %342 = vmatpush1.msra.mxu0 0.0
        %343 = vmatprep.subr.mxu0 0.0
        %344 = vmatpush1.msra.mxu0 0.0
        %345 = vmatprep.subr.mxu0 0.0
        %346 = vmatpush1.msra.mxu0 0.0
        %347 = vmatprep.subr.mxu0 0.0
        %348 = vmatpush1.msra.mxu0 0.0
        %349 = vmatprep.subr.mxu0 0.0
        %350 = vmatpush1.msra.mxu0 0.0
        %351 = vmatprep.subr.mxu0 0.0
        %352 = vmatpush1.msra.mxu0 0.0
        %353 = vmatprep.subr.mxu0 0.0
        %354 = vmatpush1.msra.mxu0 0.0
        %355 = vmatprep.subr.mxu0 0.0
        %356 = vmatpush1.msra.mxu0 0.0
        %357 = vmatprep.subr.mxu0 0.0
        %358 = vmatpush1.msra.mxu0 0.0
        %359 = vmatprep.subr.mxu0 0.0
        %360 = vmatpush1.msra.mxu0 0.0
        %361 = vmatprep.subr.mxu0 0.0
        %362 = vmatpush1.msra.mxu0 0.0
        %363 = vmatprep.subr.mxu0 0.0
        %364 = vmatpush1.msra.mxu0 0.0
        %365 = vmatprep.subr.mxu0 0.0
        %366 = vmatpush1.msra.mxu0 0.0
        %367 = vmatprep.subr.mxu0 0.0
        %368 = vmatpush1.msra.mxu0 0.0
        %369 = vmatprep.subr.mxu0 0.0
        %370 = vmatpush1.msra.mxu0 0.0
        %371 = vmatprep.subr.mxu0 0.0
        %372 = vmatpush1.msra.mxu0 0.0
        %373 = vmatprep.subr.mxu0 0.0
        %374 = vmatpush1.msra.mxu0 0.0
        %375 = vmatprep.subr.mxu0 0.0
        %376 = vmatpush1.msra.mxu0 0.0
        %377 = vmatprep.subr.mxu0 0.0
        %378 = vmatpush1.msra.mxu0 0.0
        %379 = vmatprep.subr.mxu0 0.0
        %380 = vmatpush1.msra.mxu0 0.0
        %381 = vmatprep.subr.mxu0 0.0
        %382 = vmatpush1.msra.mxu0 0.0
        %383 = vmatprep.subr.mxu0 0.0
        %384 = vmatpush1.msra.mxu0 0.0
        %385 = vmatprep.subr.mxu0 0.0
        %386 = vmatpush1.msra.mxu0 0.0
        %387 = vmatprep.subr.mxu0 0.0
        %388 = vmatpush1.msra.mxu0 0.0
        %389 = vmatprep.subr.mxu0 0.0
        %390 = vmatpush1.msra.mxu0 0.0
        %391 = vmatprep.subr.mxu0 0.0
        %392 = vmatpush1.msra.mxu0 0.0
        %393 = vmatprep.subr.mxu0 0.0
        %394 = vmatpush1.msra.mxu0 0.0
        %395 = vmatprep.subr.mxu0 0.0
        %396 = vmatpush1.msra.mxu0 0.0
        %397 = vmatprep.mubr.f32.mxu0 0.0
        %398 = vmatmul.mubr.f32.gmra.mrb[0].mxu0 %v331
        %v399 = vpop.f32.mrb[0].mxu0
        %v400 = vadd.f32 0.0, %v399
        %v401 = vpop.f32.mrb[0].mxu0
        %402 = vdwg.mxu0
        %403 = vmatprep.subr.mxu0 0.0
        %404 = vmatpush1.msra.mxu0 %v324
        %405 = vmatprep.subr.mxu0 0.0
        %406 = vmatpush1.msra.mxu0 %v325
        %407 = vmatprep.subr.mxu0 0.0
        %408 = vmatpush1.msra.mxu0 0.0
        %409 = vmatprep.subr.mxu0 0.0
        %410 = vmatpush1.msra.mxu0 0.0
        %411 = vmatprep.subr.mxu0 0.0
        %412 = vmatpush1.msra.mxu0 0.0
        %413 = vmatprep.subr.mxu0 0.0
        %414 = vmatpush1.msra.mxu0 0.0
        %415 = vmatprep.subr.mxu0 0.0
        %416 = vmatpush1.msra.mxu0 0.0
        %417 = vmatprep.subr.mxu0 0.0
        %418 = vmatpush1.msra.mxu0 0.0
        %419 = vmatprep.subr.mxu0 0.0
        %420 = vmatpush1.msra.mxu0 0.0
        %421 = vmatprep.subr.mxu0 0.0
        %422 = vmatpush1.msra.mxu0 0.0
        %423 = vmatprep.subr.mxu0 0.0
        %424 = vmatpush1.msra.mxu0 0.0
        %425 = vmatprep.subr.mxu0 0.0
        %426 = vmatpush1.msra.mxu0 0.0
        %427 = vmatprep.subr.mxu0 0.0
        %428 = vmatpush1.msra.mxu0 0.0
        %429 = vmatprep.subr.mxu0 0.0
        %430 = vmatpush1.msra.mxu0 0.0
        %431 = vmatprep.subr.mxu0 0.0
        %432 = vmatpush1.msra.mxu0 0.0
        %433 = vmatprep.subr.mxu0 0.0
        %434 = vmatpush1.msra.mxu0 0.0
        %435 = vmatprep.subr.mxu0 0.0
        %436 = vmatpush1.msra.mxu0 0.0
        %437 = vmatprep.subr.mxu0 0.0
        %438 = vmatpush1.msra.mxu0 0.0
        %439 = vmatprep.subr.mxu0 0.0
        %440 = vmatpush1.msra.mxu0 0.0
        %441 = vmatprep.subr.mxu0 0.0
        %442 = vmatpush1.msra.mxu0 0.0
        %443 = vmatprep.subr.mxu0 0.0
        %444 = vmatpush1.msra.mxu0 0.0
        %445 = vmatprep.subr.mxu0 0.0
        %446 = vmatpush1.msra.mxu0 0.0
        %447 = vmatprep.subr.mxu0 0.0
        %448 = vmatpush1.msra.mxu0 0.0
        %449 = vmatprep.subr.mxu0 0.0
        %450 = vmatpush1.msra.mxu0 0.0
        %451 = vmatprep.subr.mxu0 0.0
        %452 = vmatpush1.msra.mxu0 0.0
        %453 = vmatprep.subr.mxu0 0.0
        %454 = vmatpush1.msra.mxu0 0.0
        %455 = vmatprep.subr.mxu0 0.0
        %456 = vmatpush1.msra.mxu0 0.0
        %457 = vmatprep.subr.mxu0 0.0
        %458 = vmatpush1.msra.mxu0 0.0
        %459 = vmatprep.subr.mxu0 0.0
        %460 = vmatpush1.msra.mxu0 0.0
        %461 = vmatprep.subr.mxu0 0.0
        %462 = vmatpush1.msra.mxu0 0.0
        %463 = vmatprep.subr.mxu0 0.0
        %464 = vmatpush1.msra.mxu0 0.0
        %465 = vmatprep.subr.mxu0 0.0
        %466 = vmatpush1.msra.mxu0 0.0
        %467 = vmatprep.mubr.f32.mxu0 0.0
        %468 = vmatmul.mubr.f32.gmra.mrb[0].mxu0 %v331
        %v469 = vpop.f32.mrb[0].mxu0
        %v470 = vadd.f32 0.0, %v469
        %v471 = vpop.f32.mrb[0].mxu0
        %472 = vdwg.mxu0
        %473 = vmatprep.subr.mxu0 0.0
        %474 = vmatpush1.msra.mxu0 %v326
        %475 = vmatprep.subr.mxu0 0.0
        %476 = vmatpush1.msra.mxu0 %v327
        %477 = vmatprep.subr.mxu0 0.0
        %478 = vmatpush1.msra.mxu0 0.0
        %479 = vmatprep.subr.mxu0 0.0
        %480 = vmatpush1.msra.mxu0 0.0
        %481 = vmatprep.subr.mxu0 0.0
        %482 = vmatpush1.msra.mxu0 0.0
        %483 = vmatprep.subr.mxu0 0.0
        %484 = vmatpush1.msra.mxu0 0.0
        %485 = vmatprep.subr.mxu0 0.0
        %486 = vmatpush1.msra.mxu0 0.0
        %487 = vmatprep.subr.mxu0 0.0
        %488 = vmatpush1.msra.mxu0 0.0
        %489 = vmatprep.subr.mxu0 0.0
        %490 = vmatpush1.msra.mxu0 0.0
        %491 = vmatprep.subr.mxu0 0.0
        %492 = vmatpush1.msra.mxu0 0.0
        %493 = vmatprep.subr.mxu0 0.0
        %494 = vmatpush1.msra.mxu0 0.0
        %495 = vmatprep.subr.mxu0 0.0
        %496 = vmatpush1.msra.mxu0 0.0
        %497 = vmatprep.subr.mxu0 0.0
        %498 = vmatpush1.msra.mxu0 0.0
        %499 = vmatprep.subr.mxu0 0.0
        %500 = vmatpush1.msra.mxu0 0.0
        %501 = vmatprep.subr.mxu0 0.0
        %502 = vmatpush1.msra.mxu0 0.0
        %503 = vmatprep.subr.mxu0 0.0
        %504 = vmatpush1.msra.mxu0 0.0
        %505 = vmatprep.subr.mxu0 0.0
        %506 = vmatpush1.msra.mxu0 0.0
        %507 = vmatprep.subr.mxu0 0.0
        %508 = vmatpush1.msra.mxu0 0.0
        %509 = vmatprep.subr.mxu0 0.0
        %510 = vmatpush1.msra.mxu0 0.0
        %511 = vmatprep.subr.mxu0 0.0
        %512 = vmatpush1.msra.mxu0 0.0
        %513 = vmatprep.subr.mxu0 0.0
        %514 = vmatpush1.msra.mxu0 0.0
        %515 = vmatprep.subr.mxu0 0.0
        %516 = vmatpush1.msra.mxu0 0.0
        %517 = vmatprep.subr.mxu0 0.0
        %518 = vmatpush1.msra.mxu0 0.0
        %519 = vmatprep.subr.mxu0 0.0
        %520 = vmatpush1.msra.mxu0 0.0
        %521 = vmatprep.subr.mxu0 0.0
        %522 = vmatpush1.msra.mxu0 0.0
        %523 = vmatprep.subr.mxu0 0.0
        %524 = vmatpush1.msra.mxu0 0.0
        %525 = vmatprep.subr.mxu0 0.0
        %526 = vmatpush1.msra.mxu0 0.0
        %527 = vmatprep.subr.mxu0 0.0
        %528 = vmatpush1.msra.mxu0 0.0
        %529 = vmatprep.subr.mxu0 0.0
        %530 = vmatpush1.msra.mxu0 0.0
        %531 = vmatprep.subr.mxu0 0.0
        %532 = vmatpush1.msra.mxu0 0.0
        %533 = vmatprep.subr.mxu0 0.0
        %534 = vmatpush1.msra.mxu0 0.0
        %535 = vmatprep.subr.mxu0 0.0
        %536 = vmatpush1.msra.mxu0 0.0
        %537 = vmatprep.mubr.f32.mxu0 0.0
        %538 = vmatmul.mubr.f32.gmra.mrb[0].mxu0 %v331
        %v539 = vpop.f32.mrb[0].mxu0
        %v540 = vadd.f32 0.0, %v539
        %v541 = vpop.f32.mrb[0].mxu0
        %542 = vdwg.mxu0
        %543 = vmatprep.subr.mxu0 0.0
        %544 = vmatpush1.msra.mxu0 %v328
        %545 = vmatprep.subr.mxu0 0.0
        %546 = vmatpush1.msra.mxu0 %v329
        %547 = vmatprep.subr.mxu0 0.0
        %548 = vmatpush1.msra.mxu0 0.0
        %549 = vmatprep.subr.mxu0 0.0
        %550 = vmatpush1.msra.mxu0 0.0
        %551 = vmatprep.subr.mxu0 0.0
        %552 = vmatpush1.msra.mxu0 0.0
        %553 = vmatprep.subr.mxu0 0.0
        %554 = vmatpush1.msra.mxu0 0.0
        %555 = vmatprep.subr.mxu0 0.0
        %556 = vmatpush1.msra.mxu0 0.0
        %557 = vmatprep.subr.mxu0 0.0
        %558 = vmatpush1.msra.mxu0 0.0
        %559 = vmatprep.subr.mxu0 0.0
        %560 = vmatpush1.msra.mxu0 0.0
        %561 = vmatprep.subr.mxu0 0.0
        %562 = vmatpush1.msra.mxu0 0.0
        %563 = vmatprep.subr.mxu0 0.0
        %564 = vmatpush1.msra.mxu0 0.0
        %565 = vmatprep.subr.mxu0 0.0
        %566 = vmatpush1.msra.mxu0 0.0
        %567 = vmatprep.subr.mxu0 0.0
        %568 = vmatpush1.msra.mxu0 0.0
        %569 = vmatprep.subr.mxu0 0.0
        %570 = vmatpush1.msra.mxu0 0.0
        %571 = vmatprep.subr.mxu0 0.0
        %572 = vmatpush1.msra.mxu0 0.0
        %573 = vmatprep.subr.mxu0 0.0
        %574 = vmatpush1.msra.mxu0 0.0
        %575 = vmatprep.subr.mxu0 0.0
        %576 = vmatpush1.msra.mxu0 0.0
        %577 = vmatprep.subr.mxu0 0.0
        %578 = vmatpush1.msra.mxu0 0.0
        %579 = vmatprep.subr.mxu0 0.0
        %580 = vmatpush1.msra.mxu0 0.0
        %581 = vmatprep.subr.mxu0 0.0
        %582 = vmatpush1.msra.mxu0 0.0
        %583 = vmatprep.subr.mxu0 0.0
        %584 = vmatpush1.msra.mxu0 0.0
        %585 = vmatprep.subr.mxu0 0.0
        %586 = vmatpush1.msra.mxu0 0.0
        %587 = vmatprep.subr.mxu0 0.0
        %588 = vmatpush1.msra.mxu0 0.0
        %589 = vmatprep.subr.mxu0 0.0
        %590 = vmatpush1.msra.mxu0 0.0
        %591 = vmatprep.subr.mxu0 0.0
        %592 = vmatpush1.msra.mxu0 0.0
        %593 = vmatprep.subr.mxu0 0.0
        %594 = vmatpush1.msra.mxu0 0.0
        %595 = vmatprep.subr.mxu0 0.0
        %596 = vmatpush1.msra.mxu0 0.0
        %597 = vmatprep.subr.mxu0 0.0
        %598 = vmatpush1.msra.mxu0 0.0
        %599 = vmatprep.subr.mxu0 0.0
        %600 = vmatpush1.msra.mxu0 0.0
        %601 = vmatprep.subr.mxu0 0.0
        %602 = vmatpush1.msra.mxu0 0.0
        %603 = vmatprep.subr.mxu0 0.0
        %604 = vmatpush1.msra.mxu0 0.0
        %605 = vmatprep.subr.mxu0 0.0
        %606 = vmatpush1.msra.mxu0 0.0
        %607 = vmatprep.mubr.f32.mxu0 0.0
        %608 = vmatmul.mubr.f32.gmra.mrb[0].mxu0 %v331
        %v609 = vpop.f32.mrb[0].mxu0
        %v610 = vadd.f32 0.0, %v609
        %v611 = vpop.f32.mrb[0].mxu0
        %612 = vdwg.mxu0
        %613 = vst.msk [vmem:[%s164] sm:$0xff] %vm312, %v400
        %614 = vst.msk [vmem:[%s164 + $0x8] sm:$0xff] %vm312, %v470
        %615 = vst.msk [vmem:[%s164 + $0x10] sm:$0xff] %vm312, %v540
        %616 = vst.msk [vmem:[%s164 + $0x18] sm:$0xff] %vm312, %v610
        %s617 = sand.u32 %s93, 1
        %s618 = scalar_lea.sflag [#allocation4], %s617
        %s619 = sand.u32 %s93, 1
        %s620 = smul.addr %s619, 32
        %s621 = scalar_lea.vmem [#allocation3], %s620
        // Predicated region
        $region33: #{tpu_custom_call.1} parent=31 // pred_check
          %p622 = pneg %p103
        $region34: #{tpu_custom_call.1} parent=31 // pred_check_branch
          %624 = sbr.rel (%p622) target = $region36
        $region35: #{tpu_custom_call.1} parent=31 // pred_region
          %s625 = smul.u32 4, %s17
          %s627 = ssub.s32 512, 512
          %628 = vsyncadd %s618, %s627
          %s629 = smul.addr %s625, 128
          %s630 = scalar_lea.hbm %s3, %s629
          %s631 = sshll.u32 %s621, 4
          %s632 = int_to_ptr.vmem [resolvable:$true] %s631
          %637 = dma.vmem_to_hbm [thread:$0]  %s632, 512, %s630, %s618, 128, 128, 8
        $region36: #{tpu_custom_call.1} parent=31 // pred_fallthru
          _
      $region32: #{tpu_custom_call.1} parent=5 // pred_fallthru
        _
      %p638 = scmp.le.s32.totalorder 2, %s12
      // Predicated region
      $region37: #{tpu_custom_call.1} parent=5 // pred_check
        %p639 = pneg %p638
      $region38: #{tpu_custom_call.1} parent=5 // pred_check_branch
        %641 = sbr.rel (%p639) target = $region40
      $region39: #{tpu_custom_call.1} parent=5 // pred_region
        %s642 = ssub.s32 %s12, 2
        // Predicated region
        $region41: #{tpu_custom_call.1} parent=39 // pred_check
          %p643 = pneg %p109
        $region42: #{tpu_custom_call.1} parent=39 // pred_check_branch
          %645 = sbr.rel (%p643) target = $region44
        $region43: #{tpu_custom_call.1} parent=39 // pred_region
          %s646 = sand.u32 %s94, 1
          %s647 = scalar_lea.sflag [#allocation4], %s646
          %s648 = sand.u32 %s94, 1
          %s649 = smul.addr %s648, 32
          %s650 = scalar_lea.vmem [#allocation3], %s649
          %651 = dma.done %s647, 512
        $region44: #{tpu_custom_call.1} parent=39 // pred_fallthru
          _
      $region40: #{tpu_custom_call.1} parent=5 // pred_fallthru
        _
    $region6: #{tpu_custom_call.1} parent=1 // loop_footer
      %s16 = sadd.s32 1, %s12
    $region7: #{tpu_custom_call.1} parent=1 // loop_footer_branch
      %11 = sbr.rel target = $region3
    $region8: #{tpu_custom_call.1} parent=1 // loop_exit
      _
    %652 = vsyncpa [#allocation4], 1
    %s653 = scalar_lea.sflag [#allocation4], 1
    %654 = vsyncpa %s653, 1

</llo_original>
